<compile_context>
chip_gen: v7x
topology: tpu7x:2x2x1
jax: 0.10.0
libtpu: 0.0.40
codegen_flags: <defaults>
</compile_context>

<pallas_src>
import jax
import jax.numpy as jnp
from jax.experimental import pallas as pl
from jax.experimental.pallas import tpu as pltpu


def _plan_spatial(hw, max_rows=1024):
    """Pad H*W up to a multiple of 1024 (= 8 sublanes * 128 lanes) and pick a
    sublane-row tile.

    Returns (hw_pad, hw_rows, n_tiles) with:
      * hw_pad % 1024 == 0              (so n_rows = hw_pad // 128 is % 8 == 0)
      * hw_rows a multiple of 8 dividing n_rows, hw_rows <= max_rows
      * n_tiles = n_rows // hw_rows
    """
    hw_pad = -(-hw // 1024) * 1024
    n_rows = hw_pad // 128
    best = 8
    d = 8
    limit = min(n_rows, max_rows)
    while d <= limit:
        if n_rows % d == 0:
            best = d
        d += 8
    return hw_pad, best, n_rows // best


def _make_render_kernel(c_in, c_out, num_frames):
    def kernel(w_ref, b_ref, x_ref, o_ref):
        # w_ref: SMEM (c_out*c_in,) f32 scalars (scalar prefetch)
        # b_ref: SMEM (c_out,)      f32 scalars (scalar prefetch)
        # x_ref: VMEM (1, c_in, hw_rows, 128)
        # o_ref: VMEM (1, num_frames*c_out, hw_rows, 128)
        xs = [x_ref[0, i] for i in range(c_in)]          # dense (hw_rows, 128) tiles
        for c in range(c_out):                            # VPU mul-add chain, no MXU
            acc = xs[0] * w_ref[c * c_in]
            for i in range(1, c_in):
                acc = acc + xs[i] * w_ref[c * c_in + i]
            row = (acc + b_ref[c]).astype(o_ref.dtype)
            # Replicate into all frames with direct dense stores, frame-major
            # row order f*c_out + c (matches the (B, NF, C_out, H, W) reshape).
            for f in range(num_frames):
                o_ref[0, f * c_out + c] = row

    return kernel


def renderer_forward(image, landmarks, motion, weight, bias, *, num_frames=5):
    """image: (B, 3, H, W) float32 (NCHW, matching PyTorch).
    landmarks / motion: unused (kept for signature parity with the module).
    weight: (3, 3, 1, 1) conv weight, bias: (3,).
    Returns (B, num_frames, 3, H, W)."""
    del landmarks, motion  # unused in the reference forward
    B, C_in, H, W = image.shape
    C_out = weight.shape[0]
    HW = H * W
    rows_out = num_frames * C_out

    # Max 1024 sublane-rows (128K f32 elems) per spatial tile: double-buffered
    # (C_in + rows_out) blocks stay < ~19 MiB, safe on every generation.
    MAX_ROWS = 1024
    hw_pad, hw_rows, n_tiles = _plan_spatial(HW, MAX_ROWS)
    n_rows = hw_pad // 128

    x = image.reshape(B, C_in, HW)
    if hw_pad != HW:
        x = jnp.pad(x, ((0, 0), (0, 0), (0, hw_pad - HW)))
    x = x.reshape(B, C_in, n_rows, 128)                    # sublane-dense layout

    w_flat = weight.reshape(C_out * C_in).astype(jnp.float32)
    b_vec = bias.reshape(C_out).astype(jnp.float32)

    # VMEM budget: double-buffered input + output blocks + headroom, capped at
    # 32 MiB so it is always safe on v7x (64 MiB physical / 32 MiB scoped).
    itemsize = jnp.dtype(image.dtype).itemsize
    vmem_need = 2 * (C_in + rows_out) * hw_rows * 128 * itemsize
    vmem_limit = int(min(max(vmem_need + (8 << 20), 16 << 20), 32 << 20))

    kernel = _make_render_kernel(C_in, C_out, num_frames)

    out = pl.pallas_call(
        kernel,
        out_shape=jax.ShapeDtypeStruct((B, rows_out, n_rows, 128), image.dtype),
        grid_spec=pltpu.PrefetchScalarGridSpec(
            num_scalar_prefetch=2,                 # weights + bias -> SMEM scalars
            grid=(B, n_tiles),
            in_specs=[
                pl.BlockSpec((1, C_in, hw_rows, 128),
                             lambda b, t, w, bb: (b, 0, t, 0)),
            ],
            out_specs=pl.BlockSpec((1, rows_out, hw_rows, 128),
                                   lambda b, t, w, bb: (b, 0, t, 0)),
        ),
        compiler_params=pltpu.CompilerParams(
            dimension_semantics=("parallel", "parallel"),
            vmem_limit_bytes=vmem_limit),
    )(w_flat, b_vec, x)

    out = out.reshape(B, rows_out, hw_pad)
    if hw_pad != HW:
        out = out[:, :, :HW]
    # NOTE: the 5 materialized frame copies are required for PyTorch parity;
    # if the consumer tolerated it, emitting (B, C_out, H, W) + a lazy
    # broadcast would save ~83% of the HBM write traffic.
    return out.reshape(B, num_frames, C_out, H, W)


if __name__ == "__main__":
    key = jax.random.PRNGKey(0)
    k_img, k_lmk, k_mot, k_w, k_b = jax.random.split(key, 5)

    B, C, H, W = 2, 3, 16, 16
    image = jax.random.normal(k_img, (B, C, H, W), dtype=jnp.float32)
    landmarks = jax.random.normal(k_lmk, (B, 68, 2), dtype=jnp.float32)   # unused
    motion = jax.random.normal(k_mot, (B, 8), dtype=jnp.float32)          # unused

    # Deterministic synthetic Conv2d(3, 3, kernel_size=1) parameters.
    weight = jax.random.normal(k_w, (3, 3, 1, 1), dtype=jnp.float32) * 0.1
    bias = jax.random.normal(k_b, (3,), dtype=jnp.float32) * 0.1

    out = renderer_forward(image, landmarks, motion, weight, bias)
    out = jax.block_until_ready(out)

    # Reference check (pure JAX 1x1 conv on replicated frames).
    ref = jnp.einsum("oi,bihw->bohw", weight.reshape(3, 3), image) \
        + bias[None, :, None, None]
    ref = jnp.broadcast_to(ref[:, None], (B, 5, 3, H, W))
    assert out.shape == (B, 5, 3, H, W)
    assert jnp.allclose(out, ref, atol=1e-5, rtol=1e-5)

    print("KERNEL_OK")
</pallas_src>

<mosaic_0001>
module attributes {stable_mosaic.version = 11 : i64} {
  func.func @kernel(%arg0: i32, %arg1: i32, %arg2: memref<9xf32, #tpu.memory_space<smem>>, %arg3: memref<3xf32, #tpu.memory_space<smem>>, %arg4: memref<1x3x8x128xf32, #tpu.memory_space<vmem>>, %arg5: memref<1x15x8x128xf32, #tpu.memory_space<vmem>>) attributes {dimension_semantics = [#tpu.dimension_semantics<parallel>, #tpu.dimension_semantics<parallel>], iteration_bounds = array<i64: 2, 1>, scalar_prefetch = 2 : i64, scratch_operands = 0 : i64, tpu.core_type = #tpu.core_type<tc>, window_params = [{transform_indices = @transform_0, window_bounds = array<i64: 1, 3, 8, 128>}, {transform_indices = @transform_1, window_bounds = array<i64: 1, 15, 8, 128>}]} {
    %c0 = arith.constant 0 : index
    %c0_0 = arith.constant 0 : index
    %c0_1 = arith.constant 0 : index
    %c0_2 = arith.constant 0 : index
    %0 = vector.load %arg4[%c0, %c0_0, %c0_1, %c0_2] : memref<1x3x8x128xf32, #tpu.memory_space<vmem>>, vector<1x1x8x128xf32>
    %1 = vector.shape_cast %0 : vector<1x1x8x128xf32> to vector<8x128xf32>
    %c0_3 = arith.constant 0 : index
    %c1 = arith.constant 1 : index
    %c0_4 = arith.constant 0 : index
    %c0_5 = arith.constant 0 : index
    %2 = vector.load %arg4[%c0_3, %c1, %c0_4, %c0_5] : memref<1x3x8x128xf32, #tpu.memory_space<vmem>>, vector<1x1x8x128xf32>
    %3 = vector.shape_cast %2 : vector<1x1x8x128xf32> to vector<8x128xf32>
    %c0_6 = arith.constant 0 : index
    %c2 = arith.constant 2 : index
    %c0_7 = arith.constant 0 : index
    %c0_8 = arith.constant 0 : index
    %4 = vector.load %arg4[%c0_6, %c2, %c0_7, %c0_8] : memref<1x3x8x128xf32, #tpu.memory_space<vmem>>, vector<1x1x8x128xf32>
    %5 = vector.shape_cast %4 : vector<1x1x8x128xf32> to vector<8x128xf32>
    %c0_9 = arith.constant 0 : index
    %6 = memref.load %arg2[%c0_9] : memref<9xf32, #tpu.memory_space<smem>>
    %7 = vector.broadcast %6 : f32 to vector<8x128xf32>
    %8 = arith.mulf %1, %7 : vector<8x128xf32>
    %c1_10 = arith.constant 1 : index
    %9 = memref.load %arg2[%c1_10] : memref<9xf32, #tpu.memory_space<smem>>
    %10 = vector.broadcast %9 : f32 to vector<8x128xf32>
    %11 = arith.mulf %3, %10 : vector<8x128xf32>
    %12 = arith.addf %8, %11 : vector<8x128xf32>
    %c2_11 = arith.constant 2 : index
    %13 = memref.load %arg2[%c2_11] : memref<9xf32, #tpu.memory_space<smem>>
    %14 = vector.broadcast %13 : f32 to vector<8x128xf32>
    %15 = arith.mulf %5, %14 : vector<8x128xf32>
    %16 = arith.addf %12, %15 : vector<8x128xf32>
    %c0_12 = arith.constant 0 : index
    %17 = memref.load %arg3[%c0_12] : memref<3xf32, #tpu.memory_space<smem>>
    %18 = vector.broadcast %17 : f32 to vector<8x128xf32>
    %19 = arith.addf %16, %18 : vector<8x128xf32>
    %c0_13 = arith.constant 0 : index
    %c0_14 = arith.constant 0 : index
    %c0_15 = arith.constant 0 : index
    %c0_16 = arith.constant 0 : index
    %20 = vector.load %arg5[%c0_13, %c0_14, %c0_15, %c0_16] : memref<1x15x8x128xf32, #tpu.memory_space<vmem>>, vector<1x1x8x128xf32>
    %21 = vector.shape_cast %20 : vector<1x1x8x128xf32> to vector<8x128xf32>
    %22 = vector.shape_cast %19 : vector<8x128xf32> to vector<1x1x8x128xf32>
    tpu.vector_store %arg5[%c0_13, %c0_14, %c0_15, %c0_16], %22 {strides = array<i32>} : memref<1x15x8x128xf32, #tpu.memory_space<vmem>>, vector<1x1x8x128xf32>,
    %c0_17 = arith.constant 0 : index
    %c3 = arith.constant 3 : index
    %c0_18 = arith.constant 0 : index
    %c0_19 = arith.constant 0 : index
    %23 = vector.load %arg5[%c0_17, %c3, %c0_18, %c0_19] : memref<1x15x8x128xf32, #tpu.memory_space<vmem>>, vector<1x1x8x128xf32>
    %24 = vector.shape_cast %23 : vector<1x1x8x128xf32> to vector<8x128xf32>
    %25 = vector.shape_cast %19 : vector<8x128xf32> to vector<1x1x8x128xf32>
    tpu.vector_store %arg5[%c0_17, %c3, %c0_18, %c0_19], %25 {strides = array<i32>} : memref<1x15x8x128xf32, #tpu.memory_space<vmem>>, vector<1x1x8x128xf32>,
    %c0_20 = arith.constant 0 : index
    %c6 = arith.constant 6 : index
    %c0_21 = arith.constant 0 : index
    %c0_22 = arith.constant 0 : index
    %26 = vector.load %arg5[%c0_20, %c6, %c0_21, %c0_22] : memref<1x15x8x128xf32, #tpu.memory_space<vmem>>, vector<1x1x8x128xf32>
    %27 = vector.shape_cast %26 : vector<1x1x8x128xf32> to vector<8x128xf32>
    %28 = vector.shape_cast %19 : vector<8x128xf32> to vector<1x1x8x128xf32>
    tpu.vector_store %arg5[%c0_20, %c6, %c0_21, %c0_22], %28 {strides = array<i32>} : memref<1x15x8x128xf32, #tpu.memory_space<vmem>>, vector<1x1x8x128xf32>,
    %c0_23 = arith.constant 0 : index
    %c9 = arith.constant 9 : index
    %c0_24 = arith.constant 0 : index
    %c0_25 = arith.constant 0 : index
    %29 = vector.load %arg5[%c0_23, %c9, %c0_24, %c0_25] : memref<1x15x8x128xf32, #tpu.memory_space<vmem>>, vector<1x1x8x128xf32>
    %30 = vector.shape_cast %29 : vector<1x1x8x128xf32> to vector<8x128xf32>
    %31 = vector.shape_cast %19 : vector<8x128xf32> to vector<1x1x8x128xf32>
    tpu.vector_store %arg5[%c0_23, %c9, %c0_24, %c0_25], %31 {strides = array<i32>} : memref<1x15x8x128xf32, #tpu.memory_space<vmem>>, vector<1x1x8x128xf32>,
    %c0_26 = arith.constant 0 : index
    %c12 = arith.constant 12 : index
    %c0_27 = arith.constant 0 : index
    %c0_28 = arith.constant 0 : index
    %32 = vector.load %arg5[%c0_26, %c12, %c0_27, %c0_28] : memref<1x15x8x128xf32, #tpu.memory_space<vmem>>, vector<1x1x8x128xf32>
    %33 = vector.shape_cast %32 : vector<1x1x8x128xf32> to vector<8x128xf32>
    %34 = vector.shape_cast %19 : vector<8x128xf32> to vector<1x1x8x128xf32>
    tpu.vector_store %arg5[%c0_26, %c12, %c0_27, %c0_28], %34 {strides = array<i32>} : memref<1x15x8x128xf32, #tpu.memory_space<vmem>>, vector<1x1x8x128xf32>,
    %c3_29 = arith.constant 3 : index
    %35 = memref.load %arg2[%c3_29] : memref<9xf32, #tpu.memory_space<smem>>
    %36 = vector.broadcast %35 : f32 to vector<8x128xf32>
    %37 = arith.mulf %1, %36 : vector<8x128xf32>
    %c4 = arith.constant 4 : index
    %38 = memref.load %arg2[%c4] : memref<9xf32, #tpu.memory_space<smem>>
    %39 = vector.broadcast %38 : f32 to vector<8x128xf32>
    %40 = arith.mulf %3, %39 : vector<8x128xf32>
    %41 = arith.addf %37, %40 : vector<8x128xf32>
    %c5 = arith.constant 5 : index
    %42 = memref.load %arg2[%c5] : memref<9xf32, #tpu.memory_space<smem>>
    %43 = vector.broadcast %42 : f32 to vector<8x128xf32>
    %44 = arith.mulf %5, %43 : vector<8x128xf32>
    %45 = arith.addf %41, %44 : vector<8x128xf32>
    %c1_30 = arith.constant 1 : index
    %46 = memref.load %arg3[%c1_30] : memref<3xf32, #tpu.memory_space<smem>>
    %47 = vector.broadcast %46 : f32 to vector<8x128xf32>
    %48 = arith.addf %45, %47 : vector<8x128xf32>
    %c0_31 = arith.constant 0 : index
    %c1_32 = arith.constant 1 : index
    %c0_33 = arith.constant 0 : index
    %c0_34 = arith.constant 0 : index
    %49 = vector.load %arg5[%c0_31, %c1_32, %c0_33, %c0_34] : memref<1x15x8x128xf32, #tpu.memory_space<vmem>>, vector<1x1x8x128xf32>
    %50 = vector.shape_cast %49 : vector<1x1x8x128xf32> to vector<8x128xf32>
    %51 = vector.shape_cast %48 : vector<8x128xf32> to vector<1x1x8x128xf32>
    tpu.vector_store %arg5[%c0_31, %c1_32, %c0_33, %c0_34], %51 {strides = array<i32>} : memref<1x15x8x128xf32, #tpu.memory_space<vmem>>, vector<1x1x8x128xf32>,
    %c0_35 = arith.constant 0 : index
    %c4_36 = arith.constant 4 : index
    %c0_37 = arith.constant 0 : index
    %c0_38 = arith.constant 0 : index
    %52 = vector.load %arg5[%c0_35, %c4_36, %c0_37, %c0_38] : memref<1x15x8x128xf32, #tpu.memory_space<vmem>>, vector<1x1x8x128xf32>
    %53 = vector.shape_cast %52 : vector<1x1x8x128xf32> to vector<8x128xf32>
    %54 = vector.shape_cast %48 : vector<8x128xf32> to vector<1x1x8x128xf32>
    tpu.vector_store %arg5[%c0_35, %c4_36, %c0_37, %c0_38], %54 {strides = array<i32>} : memref<1x15x8x128xf32, #tpu.memory_space<vmem>>, vector<1x1x8x128xf32>,
    %c0_39 = arith.constant 0 : index
    %c7 = arith.constant 7 : index
    %c0_40 = arith.constant 0 : index
    %c0_41 = arith.constant 0 : index
    %55 = vector.load %arg5[%c0_39, %c7, %c0_40, %c0_41] : memref<1x15x8x128xf32, #tpu.memory_space<vmem>>, vector<1x1x8x128xf32>
    %56 = vector.shape_cast %55 : vector<1x1x8x128xf32> to vector<8x128xf32>
    %57 = vector.shape_cast %48 : vector<8x128xf32> to vector<1x1x8x128xf32>
    tpu.vector_store %arg5[%c0_39, %c7, %c0_40, %c0_41], %57 {strides = array<i32>} : memref<1x15x8x128xf32, #tpu.memory_space<vmem>>, vector<1x1x8x128xf32>,
    %c0_42 = arith.constant 0 : index
    %c10 = arith.constant 10 : index
    %c0_43 = arith.constant 0 : index
    %c0_44 = arith.constant 0 : index
    %58 = vector.load %arg5[%c0_42, %c10, %c0_43, %c0_44] : memref<1x15x8x128xf32, #tpu.memory_space<vmem>>, vector<1x1x8x128xf32>
    %59 = vector.shape_cast %58 : vector<1x1x8x128xf32> to vector<8x128xf32>
    %60 = vector.shape_cast %48 : vector<8x128xf32> to vector<1x1x8x128xf32>
    tpu.vector_store %arg5[%c0_42, %c10, %c0_43, %c0_44], %60 {strides = array<i32>} : memref<1x15x8x128xf32, #tpu.memory_space<vmem>>, vector<1x1x8x128xf32>,
    %c0_45 = arith.constant 0 : index
    %c13 = arith.constant 13 : index
    %c0_46 = arith.constant 0 : index
    %c0_47 = arith.constant 0 : index
    %61 = vector.load %arg5[%c0_45, %c13, %c0_46, %c0_47] : memref<1x15x8x128xf32, #tpu.memory_space<vmem>>, vector<1x1x8x128xf32>
    %62 = vector.shape_cast %61 : vector<1x1x8x128xf32> to vector<8x128xf32>
    %63 = vector.shape_cast %48 : vector<8x128xf32> to vector<1x1x8x128xf32>
    tpu.vector_store %arg5[%c0_45, %c13, %c0_46, %c0_47], %63 {strides = array<i32>} : memref<1x15x8x128xf32, #tpu.memory_space<vmem>>, vector<1x1x8x128xf32>,
    %c6_48 = arith.constant 6 : index
    %64 = memref.load %arg2[%c6_48] : memref<9xf32, #tpu.memory_space<smem>>
    %65 = vector.broadcast %64 : f32 to vector<8x128xf32>
    %66 = arith.mulf %1, %65 : vector<8x128xf32>
    %c7_49 = arith.constant 7 : index
    %67 = memref.load %arg2[%c7_49] : memref<9xf32, #tpu.memory_space<smem>>
    %68 = vector.broadcast %67 : f32 to vector<8x128xf32>
    %69 = arith.mulf %3, %68 : vector<8x128xf32>
    %70 = arith.addf %66, %69 : vector<8x128xf32>
    %c8 = arith.constant 8 : index
    %71 = memref.load %arg2[%c8] : memref<9xf32, #tpu.memory_space<smem>>
    %72 = vector.broadcast %71 : f32 to vector<8x128xf32>
    %73 = arith.mulf %5, %72 : vector<8x128xf32>
    %74 = arith.addf %70, %73 : vector<8x128xf32>
    %c2_50 = arith.constant 2 : index
    %75 = memref.load %arg3[%c2_50] : memref<3xf32, #tpu.memory_space<smem>>
    %76 = vector.broadcast %75 : f32 to vector<8x128xf32>
    %77 = arith.addf %74, %76 : vector<8x128xf32>
    %c0_51 = arith.constant 0 : index
    %c2_52 = arith.constant 2 : index
    %c0_53 = arith.constant 0 : index
    %c0_54 = arith.constant 0 : index
    %78 = vector.load %arg5[%c0_51, %c2_52, %c0_53, %c0_54] : memref<1x15x8x128xf32, #tpu.memory_space<vmem>>, vector<1x1x8x128xf32>
    %79 = vector.shape_cast %78 : vector<1x1x8x128xf32> to vector<8x128xf32>
    %80 = vector.shape_cast %77 : vector<8x128xf32> to vector<1x1x8x128xf32>
    tpu.vector_store %arg5[%c0_51, %c2_52, %c0_53, %c0_54], %80 {strides = array<i32>} : memref<1x15x8x128xf32, #tpu.memory_space<vmem>>, vector<1x1x8x128xf32>,
    %c0_55 = arith.constant 0 : index
    %c5_56 = arith.constant 5 : index
    %c0_57 = arith.constant 0 : index
    %c0_58 = arith.constant 0 : index
    %81 = vector.load %arg5[%c0_55, %c5_56, %c0_57, %c0_58] : memref<1x15x8x128xf32, #tpu.memory_space<vmem>>, vector<1x1x8x128xf32>
    %82 = vector.shape_cast %81 : vector<1x1x8x128xf32> to vector<8x128xf32>
    %83 = vector.shape_cast %77 : vector<8x128xf32> to vector<1x1x8x128xf32>
    tpu.vector_store %arg5[%c0_55, %c5_56, %c0_57, %c0_58], %83 {strides = array<i32>} : memref<1x15x8x128xf32, #tpu.memory_space<vmem>>, vector<1x1x8x128xf32>,
    %c0_59 = arith.constant 0 : index
    %c8_60 = arith.constant 8 : index
    %c0_61 = arith.constant 0 : index
    %c0_62 = arith.constant 0 : index
    %84 = vector.load %arg5[%c0_59, %c8_60, %c0_61, %c0_62] : memref<1x15x8x128xf32, #tpu.memory_space<vmem>>, vector<1x1x8x128xf32>
    %85 = vector.shape_cast %84 : vector<1x1x8x128xf32> to vector<8x128xf32>
    %86 = vector.shape_cast %77 : vector<8x128xf32> to vector<1x1x8x128xf32>
    tpu.vector_store %arg5[%c0_59, %c8_60, %c0_61, %c0_62], %86 {strides = array<i32>} : memref<1x15x8x128xf32, #tpu.memory_space<vmem>>, vector<1x1x8x128xf32>,
    %c0_63 = arith.constant 0 : index
    %c11 = arith.constant 11 : index
    %c0_64 = arith.constant 0 : index
    %c0_65 = arith.constant 0 : index
    %87 = vector.load %arg5[%c0_63, %c11, %c0_64, %c0_65] : memref<1x15x8x128xf32, #tpu.memory_space<vmem>>, vector<1x1x8x128xf32>
    %88 = vector.shape_cast %87 : vector<1x1x8x128xf32> to vector<8x128xf32>
    %89 = vector.shape_cast %77 : vector<8x128xf32> to vector<1x1x8x128xf32>
    tpu.vector_store %arg5[%c0_63, %c11, %c0_64, %c0_65], %89 {strides = array<i32>} : memref<1x15x8x128xf32, #tpu.memory_space<vmem>>, vector<1x1x8x128xf32>,
    %c0_66 = arith.constant 0 : index
    %c14 = arith.constant 14 : index
    %c0_67 = arith.constant 0 : index
    %c0_68 = arith.constant 0 : index
    %90 = vector.load %arg5[%c0_66, %c14, %c0_67, %c0_68] : memref<1x15x8x128xf32, #tpu.memory_space<vmem>>, vector<1x1x8x128xf32>
    %91 = vector.shape_cast %90 : vector<1x1x8x128xf32> to vector<8x128xf32>
    %92 = vector.shape_cast %77 : vector<8x128xf32> to vector<1x1x8x128xf32>
    tpu.vector_store %arg5[%c0_66, %c14, %c0_67, %c0_68], %92 {strides = array<i32>} : memref<1x15x8x128xf32, #tpu.memory_space<vmem>>, vector<1x1x8x128xf32>,
    return
  }
  func.func @transform_0(%arg0: i32, %arg1: i32, %arg2: memref<9xf32, #tpu.memory_space<smem>>, %arg3: memref<3xf32, #tpu.memory_space<smem>>) -> (i32, i32, i32, i32) {
    %c0_i32 = arith.constant 0 : i32
    %c0_i32_0 = arith.constant 0 : i32
    %c0_i32_1 = arith.constant 0 : i32
    return %arg0, %c0_i32, %arg1, %c0_i32_0 : i32, i32, i32, i32
  }
  func.func @transform_1(%arg0: i32, %arg1: i32, %arg2: memref<9xf32, #tpu.memory_space<smem>>, %arg3: memref<3xf32, #tpu.memory_space<smem>>) -> (i32, i32, i32, i32) {
    %c0_i32 = arith.constant 0 : i32
    %c0_i32_0 = arith.constant 0 : i32
    %c0_i32_1 = arith.constant 0 : i32
    return %arg0, %c0_i32, %arg1, %c0_i32_0 : i32, i32, i32, i32
  }
}

</mosaic_0001>

<llo_original>
// kernel: tpu_custom_call.1
$region0: #{tpu_custom_call.1}
  #allocation0 [shape = 'u32[]', space=smem, size = 0x4, offset = 0x4, fixed_abs, tag = 'smem constant byte address 0x4 - core index']
  #allocation1 [shape = 'u32[144,128]{1,0:T(1,128)}', space=vmem, size = 0x12000, scoped, tag = 'internal scratch']
  #allocation2 [shape = 's32[1]{0}', space=sflag, size = 0x4, scoped, tag = 'scoped memory for tpu_custom_call.1']
  #allocation3 [shape = 'u8[512]{0}', space=smem, size = 0x200, scoped, tag = 'prefetched SMEM operand 0']
  #allocation4 [shape = 'u8[512]{0}', space=smem, size = 0x200, scoped, tag = 'prefetched SMEM operand 1']
  %s0 = inlined_call_operand.hbm [shape: f32[9], index: 0, kind: input, shape index: {}]
  %s1 = inlined_call_operand.vmem [shape: f32[3], index: 1, kind: input, shape index: {}]
  %s2 = inlined_call_operand.hbm [shape: f32[2,3,8,128], index: 2, kind: input, shape index: {}]
  %s3 = inlined_call_operand.hbm [shape: f32[2,15,8,128], index: 3, kind: output, shape index: {}]
  %s4 = sld [smem:[#allocation0]]
  $region41: #{tpu_custom_call.1} parent=0
    _
  %s6 = ssub.s32 1, %s4
  %s7 = scalar_select 0, %s6, %s4
  %9 = dma.hbm_to_smem %s0, 16, [#allocation3], [#allocation2]
  %s10 = sshll.u32 %s1, 4
  %s11 = int_to_ptr.vmem [resolvable:$true] %s10
  %13 = dma.vmem_to_smem %s11, 16, [#allocation4], [#allocation2]
  %14 = dma.done [#allocation2], 32
  %15 = sfence
  $region1: #{tpu_custom_call.1} parent=0
    #allocation5 [shape = 'u8[24576]{0}', space=vmem, size = 0x6000, scoped, tag = 'input window, operand 2']
    #allocation6 [shape = 's32[2]{0}', space=sflag, size = 0x8, scoped, tag = 'scoped memory for tpu_custom_call.1']
    #allocation7 [shape = 's32[2]{0}', space=sflag, size = 0x8, scoped, tag = 'scoped memory for tpu_custom_call.1']
    #allocation8 [shape = 'u8[122880]{0}', space=vmem, size = 0x1e000, scoped, tag = 'output window, operand 0']
    %16 = vsyncpa [#allocation6], 0
    %s17 = scalar_lea.sflag [#allocation6], 1
    %18 = vsyncpa %s17, 0
    %19 = vsyncpa [#allocation7], 0
    %s20 = scalar_lea.sflag [#allocation7], 1
    %21 = vsyncpa %s20, 0
    loop: start=0, step=1, limit=4
    $region2: #{tpu_custom_call.1} parent=1 // loop_pre_header
      _
    $region3: #{tpu_custom_call.1} parent=1 // loop_header
      %s23 = sphi 0, %s27
      %p24 = scmp.ge.s32.totalorder %s23, 4
      %s30 = sphi 0, %s42
      %s31 = sphi 0, %s38
      %s32 = sphi 0, %s30
      %s33 = sphi 0, %s31
      %s34 = sphi 0, %s32
      %s35 = sphi 0, %s33
      %s47 = sphi 0, %s49
      %s50 = sphi 0, %s47
      %s51 = sphi 0, %s50
      %s67 = sphi 0, %s51
      %s75 = sphi 0, %s77
      %s78 = sphi 0, %s75
      %s79 = sphi 0, %s78
      %s95 = sphi 0, %s79
    $region4: #{tpu_custom_call.1} parent=1 // loop_header_branch
      %26 = sbr.rel (%p24) target = $region8
    $region5: #{tpu_custom_call.1} parent=1 // loop_body
      %s28 = ssub.s32 %s23, 1
      %s29 = ssub.s32 %s23, 2
      %s36 = sadd.s32 1, %s31
      %p37 = scmp.ge.s32.totalorder %s36, 1
      %s38 = scalar_select %p37, 0, %s36
      %s39 = sadd.s32 1, %s30
      %s40 = scalar_select %p37, %s39, %s30
      %p41 = scmp.ge.s32.totalorder %s40, 2
      %s42 = scalar_select %p41, 0, %s40
      %s43 = ssub.s32 %s30, %s42
      %s44 = ssub.s32 %s31, %s38
      %s45 = sor.u32 %s43, %s44
      %p46 = scmp.eq.s32.totalorder %s45, 0
      %s48 = sadd.s32 %s47, 1
      %s49 = scalar_select %p46, %s47, %s48
      %p52 = pneg %p46
      %p53 = scmp.eq.s32.totalorder %s23, 1
      %p54 = por %p52, %p53
      %p55 = scmp.ne.s32.totalorder %s47, %s50
      %p56 = scmp.eq.s32.totalorder %s23, 0
      %p57 = por %p55, %p56
      %p58 = scmp.ne.s32.totalorder %s47, %s50
      %p59 = scmp.eq.s32.totalorder %s28, 1
      %p60 = por %p58, %p59
      %p61 = scmp.ne.s32.totalorder %s50, %s51
      %p62 = scmp.eq.s32.totalorder %s28, 0
      %p63 = por %p61, %p62
      %p64 = scmp.ne.s32.totalorder %s50, %s51
      %p65 = scmp.eq.s32.totalorder %s29, 1
      %p66 = por %p64, %p65
      %p68 = scmp.ne.s32.totalorder %s51, %s67
      %p69 = scmp.eq.s32.totalorder %s29, 0
      %p70 = por %p68, %p69
      %s71 = ssub.s32 %s30, %s42
      %s72 = ssub.s32 %s31, %s38
      %s73 = sor.u32 %s71, %s72
      %p74 = scmp.eq.s32.totalorder %s73, 0
      %s76 = sadd.s32 %s75, 1
      %s77 = scalar_select %p74, %s75, %s76
      %p80 = pneg %p74
      %p81 = scmp.eq.s32.totalorder %s23, 1
      %p82 = por %p80, %p81
      %p83 = scmp.ne.s32.totalorder %s75, %s78
      %p84 = scmp.eq.s32.totalorder %s23, 0
      %p85 = por %p83, %p84
      %p86 = scmp.ne.s32.totalorder %s75, %s78
      %p87 = scmp.eq.s32.totalorder %s28, 1
      %p88 = por %p86, %p87
      %p89 = scmp.ne.s32.totalorder %s78, %s79
      %p90 = scmp.eq.s32.totalorder %s28, 0
      %p91 = por %p89, %p90
      %p92 = scmp.ne.s32.totalorder %s78, %s79
      %p93 = scmp.eq.s32.totalorder %s29, 1
      %p94 = por %p92, %p93
      %p96 = scmp.ne.s32.totalorder %s79, %s95
      %p97 = scmp.eq.s32.totalorder %s29, 0
      %p98 = por %p96, %p97
      %p99 = scmp.le.s32.totalorder 1, %s23
      %p100 = scmp.lt.s32.totalorder %s23, 3
      %p101 = pnand %p99, %p100
      %p102 = pneg %p101
      // Predicated region
      $region9: #{tpu_custom_call.1} parent=5 // pred_check
        _
      $region10: #{tpu_custom_call.1} parent=5 // pred_check_branch
        %104 = sbr.rel (%p101) target = $region12
      $region11: #{tpu_custom_call.1} parent=5 // pred_region
        %s105 = ssub.s32 %s23, 1
      $region12: #{tpu_custom_call.1} parent=5 // pred_fallthru
        _
      %p106 = scmp.lt.s32.totalorder %s23, 2
      // Predicated region
      $region13: #{tpu_custom_call.1} parent=5 // pred_check
        %p107 = pneg %p106
      $region14: #{tpu_custom_call.1} parent=5 // pred_check_branch
        %109 = sbr.rel (%p107) target = $region16
      $region15: #{tpu_custom_call.1} parent=5 // pred_region
        // Predicated region
        $region17: #{tpu_custom_call.1} parent=15 // pred_check
          %p110 = pneg %p57
        $region18: #{tpu_custom_call.1} parent=15 // pred_check_branch
          %112 = sbr.rel (%p110) target = $region20
        $region19: #{tpu_custom_call.1} parent=15 // pred_region
          %s113 = sand.u32 %s47, 1
          %s114 = scalar_lea.sflag [#allocation6], %s113
          %s115 = sand.u32 %s47, 1
          %s116 = smul.addr %s115, 24
          %s117 = scalar_lea.vmem [#allocation5], %s116
          %s119 = ssub.s32 384, 384
          %120 = vsyncadd %s114, %s119
          %s121 = smul.addr %s30, 3
          %s122 = sadd.s32 %s31, %s121
          %s123 = smul.addr %s122, 128
          %s124 = scalar_lea.hbm %s2, %s123
          %s125 = sshll.u32 %s117, 4
          %s126 = int_to_ptr.vmem [resolvable:$true] %s125
          %131 = dma.hbm_to_vmem [thread:$0]  %s124, 384, %s126, %s114, 128, 128, 8
        $region20: #{tpu_custom_call.1} parent=15 // pred_fallthru
          _
      $region16: #{tpu_custom_call.1} parent=5 // pred_fallthru
        _
      %p132 = scmp.le.s32.totalorder 1, %s23
      %p133 = scmp.lt.s32.totalorder %s23, 3
      %p134 = pnand %p132, %p133
      %p135 = pneg %p134
      // Predicated region
      $region21: #{tpu_custom_call.1} parent=5 // pred_check
        _
      $region22: #{tpu_custom_call.1} parent=5 // pred_check_branch
        %137 = sbr.rel (%p134) target = $region24
      $region23: #{tpu_custom_call.1} parent=5 // pred_region
        %s138 = ssub.s32 %s23, 1
        %s139 = sand.u32 %s50, 1
        %s140 = scalar_lea.sflag [#allocation6], %s139
        %s141 = sand.u32 %s50, 1
        %s142 = smul.addr %s141, 24
        %s143 = scalar_lea.vmem [#allocation5], %s142
        // Predicated region
        $region25: #{tpu_custom_call.1} parent=23 // pred_check
          %p144 = pneg %p63
        $region26: #{tpu_custom_call.1} parent=23 // pred_check_branch
          %146 = sbr.rel (%p144) target = $region28
        $region27: #{tpu_custom_call.1} parent=23 // pred_region
          %147 = dma.done %s140, 384
        $region28: #{tpu_custom_call.1} parent=23 // pred_fallthru
          _
        %s148 = sand.u32 %s50, 1
        %s149 = scalar_lea.sflag [#allocation6], %s148
        %s150 = sand.u32 %s50, 1
        %s151 = smul.addr %s150, 24
        %s152 = scalar_lea.vmem [#allocation5], %s151
        %p153 = pneg %p63
        %p154 = pneg %p60
        %p155 = pneg %p91
        %p156 = pneg %p88
        %s157 = sand.u32 %s78, 1
        %s158 = scalar_lea.sflag [#allocation7], %s157
        %s159 = sand.u32 %s78, 1
        %s160 = smul.addr %s159, 120
        %s161 = scalar_lea.vmem [#allocation8], %s160
        %v162 = vld [vmem:[%s143] sm:$0xff]
        %s163 = scalar_lea.vmem %s143, 8 [#allocation5]
        %v164 = vld [vmem:[%s163] sm:$0xff]
        %s165 = scalar_lea.vmem %s143, 16 [#allocation5]
        %v166 = vld [vmem:[%s165] sm:$0xff]
        %s167 = sld [smem:[#allocation3]]
        %v168 = vstv %s167
        %v169 = vmul.f32 %v162, %v168
        %s170 = sld [smem:[#allocation3 + $0x1]]
        %v171 = vstv %s170
        %v172 = vmul.f32 %v164, %v171
        %v173 = vadd.f32 %v169, %v172
        %s174 = sld [smem:[#allocation3 + $0x2]]
        %v175 = vstv %s174
        %v176 = vmul.f32 %v166, %v175
        %v177 = vadd.f32 %v173, %v176
        %s178 = sld [smem:[#allocation4]]
        %v179 = vstv %s178
        %v180 = vadd.f32 %v177, %v179
        %181 = vst [vmem:[%s161] sm:$0xff] %v180
        %s182 = scalar_lea.vmem %s161, 24 [#allocation8]
        %183 = vst [vmem:[%s182] sm:$0xff] %v180
        %s184 = scalar_lea.vmem %s161, 48 [#allocation8]
        %185 = vst [vmem:[%s184] sm:$0xff] %v180
        %s186 = scalar_lea.vmem %s161, 72 [#allocation8]
        %187 = vst [vmem:[%s186] sm:$0xff] %v180
        %s188 = scalar_lea.vmem %s161, 96 [#allocation8]
        %189 = vst [vmem:[%s188] sm:$0xff] %v180
        %s190 = sld [smem:[#allocation3 + $0x3]]
        %v191 = vstv %s190
        %v192 = vmul.f32 %v162, %v191
        %s193 = sld [smem:[#allocation3 + $0x4]]
        %v194 = vstv %s193
        %v195 = vmul.f32 %v164, %v194
        %v196 = vadd.f32 %v192, %v195
        %s197 = sld [smem:[#allocation3 + $0x5]]
        %v198 = vstv %s197
        %v199 = vmul.f32 %v166, %v198
        %v200 = vadd.f32 %v196, %v199
        %s201 = sld [smem:[#allocation4 + $0x1]]
        %v202 = vstv %s201
        %v203 = vadd.f32 %v200, %v202
        %s204 = scalar_lea.vmem %s161, 8 [#allocation8]
        %205 = vst [vmem:[%s204] sm:$0xff] %v203
        %s206 = scalar_lea.vmem %s161, 32 [#allocation8]
        %207 = vst [vmem:[%s206] sm:$0xff] %v203
        %s208 = scalar_lea.vmem %s161, 56 [#allocation8]
        %209 = vst [vmem:[%s208] sm:$0xff] %v203
        %s210 = scalar_lea.vmem %s161, 80 [#allocation8]
        %211 = vst [vmem:[%s210] sm:$0xff] %v203
        %s212 = scalar_lea.vmem %s161, 104 [#allocation8]
        %213 = vst [vmem:[%s212] sm:$0xff] %v203
        %s214 = sld [smem:[#allocation3 + $0x6]]
        %v215 = vstv %s214
        %v216 = vmul.f32 %v162, %v215
        %s217 = sld [smem:[#allocation3 + $0x7]]
        %v218 = vstv %s217
        %v219 = vmul.f32 %v164, %v218
        %v220 = vadd.f32 %v216, %v219
        %s221 = sld [smem:[#allocation3 + $0x8]]
        %v222 = vstv %s221
        %v223 = vmul.f32 %v166, %v222
        %v224 = vadd.f32 %v220, %v223
        %s225 = sld [smem:[#allocation4 + $0x2]]
        %v226 = vstv %s225
        %v227 = vadd.f32 %v224, %v226
        %s228 = scalar_lea.vmem %s161, 16 [#allocation8]
        %229 = vst [vmem:[%s228] sm:$0xff] %v227
        %s230 = scalar_lea.vmem %s161, 40 [#allocation8]
        %231 = vst [vmem:[%s230] sm:$0xff] %v227
        %s232 = scalar_lea.vmem %s161, 64 [#allocation8]
        %233 = vst [vmem:[%s232] sm:$0xff] %v227
        %s234 = scalar_lea.vmem %s161, 88 [#allocation8]
        %235 = vst [vmem:[%s234] sm:$0xff] %v227
        %s236 = scalar_lea.vmem %s161, 112 [#allocation8]
        %237 = vst [vmem:[%s236] sm:$0xff] %v227
        %s238 = sand.u32 %s78, 1
        %s239 = scalar_lea.sflag [#allocation7], %s238
        %s240 = sand.u32 %s78, 1
        %s241 = smul.addr %s240, 120
        %s242 = scalar_lea.vmem [#allocation8], %s241
        // Predicated region
        $region29: #{tpu_custom_call.1} parent=23 // pred_check
          %p243 = pneg %p88
        $region30: #{tpu_custom_call.1} parent=23 // pred_check_branch
          %245 = sbr.rel (%p243) target = $region32
        $region31: #{tpu_custom_call.1} parent=23 // pred_region
          %s247 = ssub.s32 1920, 1920
          %248 = vsyncadd %s239, %s247
          %s249 = smul.addr %s32, 15
          %s250 = sadd.s32 %s33, %s249
          %s251 = smul.addr %s250, 128
          %s252 = scalar_lea.hbm %s3, %s251
          %s253 = sshll.u32 %s242, 4
          %s254 = int_to_ptr.vmem [resolvable:$true] %s253
          %259 = dma.vmem_to_hbm [thread:$0]  %s254, 1920, %s252, %s239, 128, 128, 8
        $region32: #{tpu_custom_call.1} parent=23 // pred_fallthru
          _
      $region24: #{tpu_custom_call.1} parent=5 // pred_fallthru
        _
      %p260 = scmp.le.s32.totalorder 2, %s23
      // Predicated region
      $region33: #{tpu_custom_call.1} parent=5 // pred_check
        %p261 = pneg %p260
      $region34: #{tpu_custom_call.1} parent=5 // pred_check_branch
        %263 = sbr.rel (%p261) target = $region36
      $region35: #{tpu_custom_call.1} parent=5 // pred_region
        %s264 = ssub.s32 %s23, 2
        // Predicated region
        $region37: #{tpu_custom_call.1} parent=35 // pred_check
          %p265 = pneg %p94
        $region38: #{tpu_custom_call.1} parent=35 // pred_check_branch
          %267 = sbr.rel (%p265) target = $region40
        $region39: #{tpu_custom_call.1} parent=35 // pred_region
          %s268 = sand.u32 %s79, 1
          %s269 = scalar_lea.sflag [#allocation7], %s268
          %s270 = sand.u32 %s79, 1
          %s271 = smul.addr %s270, 120
          %s272 = scalar_lea.vmem [#allocation8], %s271
          %273 = dma.done %s269, 1920
        $region40: #{tpu_custom_call.1} parent=35 // pred_fallthru
          _
      $region36: #{tpu_custom_call.1} parent=5 // pred_fallthru
        _
    $region6: #{tpu_custom_call.1} parent=1 // loop_footer
      %s27 = sadd.s32 1, %s23
    $region7: #{tpu_custom_call.1} parent=1 // loop_footer_branch
      %22 = sbr.rel target = $region3
    $region8: #{tpu_custom_call.1} parent=1 // loop_exit
      _
    %274 = vsyncpa [#allocation6], 1
    %s275 = scalar_lea.sflag [#allocation6], 1
    %276 = vsyncpa %s275, 1
    %277 = vsyncpa [#allocation7], 1
    %s278 = scalar_lea.sflag [#allocation7], 1
    %279 = vsyncpa %s278, 1

</llo_original>
